<compile_context>
chip_gen: v5e
topology: v5e:2x2
jax: 0.10.0
libtpu: 0.0.40
codegen_flags: <defaults>
</compile_context>

<pallas_src>
import jax
import jax.numpy as jnp
from jax import lax
from jax.experimental import pallas as pl
from jax.experimental.pallas import tpu as pltpu

B = 2            # batch
C_IN = 3
C_OUT = 8
H = W = 30       # input spatial: 30 -> conv 28 -> pool 14; 8*14*14 = 1568
K = 3            # conv kernel
OH = OW = H - K + 1          # 28
PH = PW = OH // 2            # 14
S = PH * PW                  # 196 pooled spatial positions
PATCH = C_IN * K * K         # 27
FC_IN = C_OUT * S            # 1568
FC_OUT = 5


# ---------------------------------------------------------------------------
# Fused kernel: conv(matmul) + bias + ReLU + 2x2 max-pool + FC, one batch
# element per grid step.
#   p_ref  : (1, 4, 27, 196) pool-window-grouped im2col patches (spatial on lanes)
#   wc_ref : (8, 27)         conv weight, (cin,kh,kw) flattened
#   bc_ref : (8, 1)          conv bias (broadcast over lanes)
#   wf_ref : (8, 5, 196)     FC weight permuted to (c_out, fc_out, spatial)
#   bf_ref : (1, 5)          FC bias
#   o_ref  : (1, 1, 5)       logits for this batch element
# ---------------------------------------------------------------------------
def fused_cnn_kernel(p_ref, wc_ref, bc_ref, wf_ref, bf_ref, o_ref):
    wc = wc_ref[...]                       # (8, 27)
    bc = bc_ref[...]                       # (8, 1)

    # conv + bias + ReLU + max over the 4 pool-window positions (static unroll)
    pooled = None
    for i in range(4):
        y = jnp.dot(wc, p_ref[0, i], preferred_element_type=jnp.float32) + bc
        y = jnp.maximum(y, 0.0)                              # ReLU
        pooled = y if pooled is None else jnp.maximum(pooled, y)
    # pooled: (8, 196), lane-dense, resident in registers/VMEM only.

    # FC: out[o] = sum_{c,s} pooled[c, s] * wf[c, o, s] + bf[o]
    # done as 8 tiny NT matmuls (contract the lane axis s), accumulated in f32.
    acc = None
    for c in range(C_OUT):
        part = lax.dot_general(
            pooled[c:c + 1, :],            # (1, 196)
            wf_ref[c],                     # (5, 196)
            dimension_numbers=(((1,), (1,)), ((), ())),
            preferred_element_type=jnp.float32)              # (1, 5)
        acc = part if acc is None else acc + part

    o_ref[0] = acc + bf_ref[...]


def _im2col_pool_groups_t(x):
    """x: (B,3,30,30) -> (B, 4, 27, 196).

    [b, dh*2+dw, c*9+kh*3+kw, ph*14+pw] = x[b, c, 2*ph+dh+kh, 2*pw+dw+kw]
    i.e. im2col patches grouped by 2x2 pool-window position, with the pooled
    spatial index last (so it lands on lanes inside the kernel).
    """
    # shifts[kh, kw, b, c, oh, ow] = x[b, c, oh+kh, ow+kw]
    shifts = jnp.stack(
        [jnp.stack([x[:, :, i:i + OH, j:j + OW] for j in range(K)], axis=0)
         for i in range(K)],
        axis=0,
    )                                                      # (3,3,B,3,28,28)
    t = jnp.transpose(shifts, (2, 3, 0, 1, 4, 5))          # (B,c,kh,kw,oh,ow)
    t = t.reshape(B, C_IN, K, K, PH, 2, PW, 2)             # oh=(ph,dh), ow=(pw,dw)
    t = jnp.transpose(t, (0, 5, 7, 1, 2, 3, 4, 6))         # (b,dh,dw,c,kh,kw,ph,pw)
    return t.reshape(B, 4, PATCH, S)


def _mosaic_params():
    for name in ("CompilerParams", "TPUCompilerParams"):
        cls = getattr(pltpu, name, None)
        if cls is not None:
            try:
                return cls(dimension_semantics=("parallel",))
            except TypeError:
                continue
    return None


def simple_cnn_forward(x, wc, bc, wf, bf):
    """x: (B,3,30,30) NCHW; wc: (8,3,3,3); bc: (8,); wf: (5,1568); bf: (5,)."""
    p4t = _im2col_pool_groups_t(x)                          # (B, 4, 27, 196)
    wc_flat = wc.reshape(C_OUT, PATCH)                      # (8, 27)
    bc_col = bc.reshape(C_OUT, 1)                           # (8, 1)
    # One-time FC weight permutation that folds PyTorch's (b, c, h, w) flatten
    # order into the weight: wf_p[c, o, s] = wf[o, c*196 + s].
    wf_p = wf.reshape(FC_OUT, C_OUT, S).transpose(1, 0, 2)  # (8, 5, 196)
    bf_row = bf.reshape(1, FC_OUT)                          # (1, 5)

    out3 = pl.pallas_call(
        fused_cnn_kernel,
        out_shape=jax.ShapeDtypeStruct((B, 1, FC_OUT), jnp.float32),
        grid=(B,),
        in_specs=[
            pl.BlockSpec((1, 4, PATCH, S), lambda b: (b, 0, 0, 0)),
            pl.BlockSpec((C_OUT, PATCH), lambda b: (0, 0)),
            pl.BlockSpec((C_OUT, 1), lambda b: (0, 0)),
            pl.BlockSpec((C_OUT, FC_OUT, S), lambda b: (0, 0, 0)),
            pl.BlockSpec((1, FC_OUT), lambda b: (0, 0)),
        ],
        out_specs=pl.BlockSpec((1, 1, FC_OUT), lambda b: (b, 0, 0)),
        compiler_params=_mosaic_params(),
    )(p4t, wc_flat, bc_col, wf_p, bf_row)
    return out3.reshape(B, FC_OUT)


def reference_forward(x, wc, bc, wf, bf):
    """Pure-JAX reference replicating the PyTorch forward exactly."""
    y = lax.conv_general_dilated(
        x, wc, window_strides=(1, 1), padding="VALID",
        dimension_numbers=("NCHW", "OIHW", "NCHW"),
    ) + bc.reshape(1, C_OUT, 1, 1)
    y = jnp.maximum(y, 0.0)
    y = lax.reduce_window(
        y, -jnp.inf, lax.max,
        window_dimensions=(1, 1, 2, 2), window_strides=(1, 1, 2, 2),
        padding="VALID",
    )
    y = y.reshape(B, -1)
    return y @ wf.T + bf


if __name__ == "__main__":
    key = jax.random.PRNGKey(0)
    kx, kwc, kbc, kwf, kbf = jax.random.split(key, 5)

    x = jax.random.normal(kx, (B, C_IN, H, W), dtype=jnp.float32)
    # deterministic synthetic parameters (shapes match nn.Conv2d / nn.Linear)
    wc = jax.random.normal(kwc, (C_OUT, C_IN, K, K), dtype=jnp.float32) * 0.1
    bc = jax.random.normal(kbc, (C_OUT,), dtype=jnp.float32) * 0.1
    wf = jax.random.normal(kwf, (FC_OUT, FC_IN), dtype=jnp.float32) * 0.02
    bf = jax.random.normal(kbf, (FC_OUT,), dtype=jnp.float32) * 0.02

    out = jax.jit(simple_cnn_forward)(x, wc, bc, wf, bf)
    out = jax.block_until_ready(out)

    ref = reference_forward(x, wc, bc, wf, bf)
    assert out.shape == (B, FC_OUT)
    assert jnp.allclose(out, ref, atol=1e-4, rtol=1e-4), "mismatch vs reference"

    print("KERNEL_OK")
</pallas_src>

<mosaic_0001>
module attributes {stable_mosaic.version = 11 : i64} {
  func.func @fused_cnn_kernel(%arg0: i32, %arg1: memref<1x4x27x196xf32, #tpu.memory_space<vmem>>, %arg2: memref<8x27xf32, #tpu.memory_space<vmem>>, %arg3: memref<8x1xf32, #tpu.memory_space<vmem>>, %arg4: memref<8x5x196xf32, #tpu.memory_space<vmem>>, %arg5: memref<1x5xf32, #tpu.memory_space<vmem>>, %arg6: memref<1x1x5xf32, #tpu.memory_space<vmem>>) attributes {dimension_semantics = [#tpu.dimension_semantics<parallel>], iteration_bounds = array<i64: 2>, scalar_prefetch = 0 : i64, scratch_operands = 0 : i64, tpu.core_type = #tpu.core_type<tc>, window_params = [{transform_indices = @transform_0, window_bounds = array<i64: 1, 4, 27, 196>}, {pipeline_mode = #tpu.pipeline_mode<synchronous>, transform_indices = @transform_1, window_bounds = array<i64: 8, 27>}, {pipeline_mode = #tpu.pipeline_mode<synchronous>, transform_indices = @transform_2, window_bounds = array<i64: 8, 1>}, {pipeline_mode = #tpu.pipeline_mode<synchronous>, transform_indices = @transform_3, window_bounds = array<i64: 8, 5, 196>}, {pipeline_mode = #tpu.pipeline_mode<synchronous>, transform_indices = @transform_4, window_bounds = array<i64: 1, 5>}, {transform_indices = @transform_5, window_bounds = array<i64: 1, 1, 5>}]} {
    %c0 = arith.constant 0 : index
    %c0_0 = arith.constant 0 : index
    %0 = vector.load %arg2[%c0, %c0_0] : memref<8x27xf32, #tpu.memory_space<vmem>>, vector<8x27xf32>
    %c0_1 = arith.constant 0 : index
    %c0_2 = arith.constant 0 : index
    %1 = vector.load %arg3[%c0_1, %c0_2] : memref<8x1xf32, #tpu.memory_space<vmem>>, vector<8x1xf32>
    %c0_3 = arith.constant 0 : index
    %c0_4 = arith.constant 0 : index
    %c0_5 = arith.constant 0 : index
    %c0_6 = arith.constant 0 : index
    %2 = vector.load %arg1[%c0_3, %c0_4, %c0_5, %c0_6] : memref<1x4x27x196xf32, #tpu.memory_space<vmem>>, vector<1x1x27x196xf32>
    %3 = vector.shape_cast %2 : vector<1x1x27x196xf32> to vector<27x196xf32>
    %cst = arith.constant dense<0.000000e+00> : vector<8x196xf32>
    %4 = tpu.matmul %0, %3, %cst {dimension_numbers = #tpu.dot_dimension_numbers<[1], [0], [0], [1], [0, 0, 1, 1], [], []>} : vector<8x27xf32>, vector<27x196xf32>, vector<8x196xf32> -> vector<8x196xf32>
    %5 = vector.broadcast %1 : vector<8x1xf32> to vector<8x196xf32>
    %6 = arith.addf %4, %5 : vector<8x196xf32>
    %cst_7 = arith.constant 0.000000e+00 : f32
    %7 = vector.broadcast %cst_7 : f32 to vector<8x196xf32>
    %8 = arith.maximumf %6, %7 : vector<8x196xf32>
    %c0_8 = arith.constant 0 : index
    %c1 = arith.constant 1 : index
    %c0_9 = arith.constant 0 : index
    %c0_10 = arith.constant 0 : index
    %9 = vector.load %arg1[%c0_8, %c1, %c0_9, %c0_10] : memref<1x4x27x196xf32, #tpu.memory_space<vmem>>, vector<1x1x27x196xf32>
    %10 = vector.shape_cast %9 : vector<1x1x27x196xf32> to vector<27x196xf32>
    %cst_11 = arith.constant dense<0.000000e+00> : vector<8x196xf32>
    %11 = tpu.matmul %0, %10, %cst_11 {dimension_numbers = #tpu.dot_dimension_numbers<[1], [0], [0], [1], [0, 0, 1, 1], [], []>} : vector<8x27xf32>, vector<27x196xf32>, vector<8x196xf32> -> vector<8x196xf32>
    %12 = vector.broadcast %1 : vector<8x1xf32> to vector<8x196xf32>
    %13 = arith.addf %11, %12 : vector<8x196xf32>
    %cst_12 = arith.constant 0.000000e+00 : f32
    %14 = vector.broadcast %cst_12 : f32 to vector<8x196xf32>
    %15 = arith.maximumf %13, %14 : vector<8x196xf32>
    %16 = arith.maximumf %8, %15 : vector<8x196xf32>
    %c0_13 = arith.constant 0 : index
    %c2 = arith.constant 2 : index
    %c0_14 = arith.constant 0 : index
    %c0_15 = arith.constant 0 : index
    %17 = vector.load %arg1[%c0_13, %c2, %c0_14, %c0_15] : memref<1x4x27x196xf32, #tpu.memory_space<vmem>>, vector<1x1x27x196xf32>
    %18 = vector.shape_cast %17 : vector<1x1x27x196xf32> to vector<27x196xf32>
    %cst_16 = arith.constant dense<0.000000e+00> : vector<8x196xf32>
    %19 = tpu.matmul %0, %18, %cst_16 {dimension_numbers = #tpu.dot_dimension_numbers<[1], [0], [0], [1], [0, 0, 1, 1], [], []>} : vector<8x27xf32>, vector<27x196xf32>, vector<8x196xf32> -> vector<8x196xf32>
    %20 = vector.broadcast %1 : vector<8x1xf32> to vector<8x196xf32>
    %21 = arith.addf %19, %20 : vector<8x196xf32>
    %cst_17 = arith.constant 0.000000e+00 : f32
    %22 = vector.broadcast %cst_17 : f32 to vector<8x196xf32>
    %23 = arith.maximumf %21, %22 : vector<8x196xf32>
    %24 = arith.maximumf %16, %23 : vector<8x196xf32>
    %c0_18 = arith.constant 0 : index
    %c3 = arith.constant 3 : index
    %c0_19 = arith.constant 0 : index
    %c0_20 = arith.constant 0 : index
    %25 = vector.load %arg1[%c0_18, %c3, %c0_19, %c0_20] : memref<1x4x27x196xf32, #tpu.memory_space<vmem>>, vector<1x1x27x196xf32>
    %26 = vector.shape_cast %25 : vector<1x1x27x196xf32> to vector<27x196xf32>
    %cst_21 = arith.constant dense<0.000000e+00> : vector<8x196xf32>
    %27 = tpu.matmul %0, %26, %cst_21 {dimension_numbers = #tpu.dot_dimension_numbers<[1], [0], [0], [1], [0, 0, 1, 1], [], []>} : vector<8x27xf32>, vector<27x196xf32>, vector<8x196xf32> -> vector<8x196xf32>
    %28 = vector.broadcast %1 : vector<8x1xf32> to vector<8x196xf32>
    %29 = arith.addf %27, %28 : vector<8x196xf32>
    %cst_22 = arith.constant 0.000000e+00 : f32
    %30 = vector.broadcast %cst_22 : f32 to vector<8x196xf32>
    %31 = arith.maximumf %29, %30 : vector<8x196xf32>
    %32 = arith.maximumf %24, %31 : vector<8x196xf32>
    %33 = vector.extract_strided_slice %32 {offsets = [0, 0], sizes = [1, 196], strides = [1, 1]} : vector<8x196xf32> to vector<1x196xf32>
    %c0_23 = arith.constant 0 : index
    %c0_24 = arith.constant 0 : index
    %c0_25 = arith.constant 0 : index
    %34 = vector.load %arg4[%c0_23, %c0_24, %c0_25] : memref<8x5x196xf32, #tpu.memory_space<vmem>>, vector<1x5x196xf32>
    %35 = vector.shape_cast %34 : vector<1x5x196xf32> to vector<5x196xf32>
    %cst_26 = arith.constant dense<0.000000e+00> : vector<1x5xf32>
    %36 = tpu.matmul %33, %35, %cst_26 {dimension_numbers = #tpu.dot_dimension_numbers<[1], [1], [0], [0], [0, 0, 1, 0], [], []>} : vector<1x196xf32>, vector<5x196xf32>, vector<1x5xf32> -> vector<1x5xf32>
    %37 = vector.extract_strided_slice %32 {offsets = [1, 0], sizes = [1, 196], strides = [1, 1]} : vector<8x196xf32> to vector<1x196xf32>
    %c1_27 = arith.constant 1 : index
    %c0_28 = arith.constant 0 : index
    %c0_29 = arith.constant 0 : index
    %38 = vector.load %arg4[%c1_27, %c0_28, %c0_29] : memref<8x5x196xf32, #tpu.memory_space<vmem>>, vector<1x5x196xf32>
    %39 = vector.shape_cast %38 : vector<1x5x196xf32> to vector<5x196xf32>
    %cst_30 = arith.constant dense<0.000000e+00> : vector<1x5xf32>
    %40 = tpu.matmul %37, %39, %cst_30 {dimension_numbers = #tpu.dot_dimension_numbers<[1], [1], [0], [0], [0, 0, 1, 0], [], []>} : vector<1x196xf32>, vector<5x196xf32>, vector<1x5xf32> -> vector<1x5xf32>
    %41 = arith.addf %36, %40 : vector<1x5xf32>
    %42 = vector.extract_strided_slice %32 {offsets = [2, 0], sizes = [1, 196], strides = [1, 1]} : vector<8x196xf32> to vector<1x196xf32>
    %c2_31 = arith.constant 2 : index
    %c0_32 = arith.constant 0 : index
    %c0_33 = arith.constant 0 : index
    %43 = vector.load %arg4[%c2_31, %c0_32, %c0_33] : memref<8x5x196xf32, #tpu.memory_space<vmem>>, vector<1x5x196xf32>
    %44 = vector.shape_cast %43 : vector<1x5x196xf32> to vector<5x196xf32>
    %cst_34 = arith.constant dense<0.000000e+00> : vector<1x5xf32>
    %45 = tpu.matmul %42, %44, %cst_34 {dimension_numbers = #tpu.dot_dimension_numbers<[1], [1], [0], [0], [0, 0, 1, 0], [], []>} : vector<1x196xf32>, vector<5x196xf32>, vector<1x5xf32> -> vector<1x5xf32>
    %46 = arith.addf %41, %45 : vector<1x5xf32>
    %47 = vector.extract_strided_slice %32 {offsets = [3, 0], sizes = [1, 196], strides = [1, 1]} : vector<8x196xf32> to vector<1x196xf32>
    %c3_35 = arith.constant 3 : index
    %c0_36 = arith.constant 0 : index
    %c0_37 = arith.constant 0 : index
    %48 = vector.load %arg4[%c3_35, %c0_36, %c0_37] : memref<8x5x196xf32, #tpu.memory_space<vmem>>, vector<1x5x196xf32>
    %49 = vector.shape_cast %48 : vector<1x5x196xf32> to vector<5x196xf32>
    %cst_38 = arith.constant dense<0.000000e+00> : vector<1x5xf32>
    %50 = tpu.matmul %47, %49, %cst_38 {dimension_numbers = #tpu.dot_dimension_numbers<[1], [1], [0], [0], [0, 0, 1, 0], [], []>} : vector<1x196xf32>, vector<5x196xf32>, vector<1x5xf32> -> vector<1x5xf32>
    %51 = arith.addf %46, %50 : vector<1x5xf32>
    %52 = vector.extract_strided_slice %32 {offsets = [4, 0], sizes = [1, 196], strides = [1, 1]} : vector<8x196xf32> to vector<1x196xf32>
    %c4 = arith.constant 4 : index
    %c0_39 = arith.constant 0 : index
    %c0_40 = arith.constant 0 : index
    %53 = vector.load %arg4[%c4, %c0_39, %c0_40] : memref<8x5x196xf32, #tpu.memory_space<vmem>>, vector<1x5x196xf32>
    %54 = vector.shape_cast %53 : vector<1x5x196xf32> to vector<5x196xf32>
    %cst_41 = arith.constant dense<0.000000e+00> : vector<1x5xf32>
    %55 = tpu.matmul %52, %54, %cst_41 {dimension_numbers = #tpu.dot_dimension_numbers<[1], [1], [0], [0], [0, 0, 1, 0], [], []>} : vector<1x196xf32>, vector<5x196xf32>, vector<1x5xf32> -> vector<1x5xf32>
    %56 = arith.addf %51, %55 : vector<1x5xf32>
    %57 = vector.extract_strided_slice %32 {offsets = [5, 0], sizes = [1, 196], strides = [1, 1]} : vector<8x196xf32> to vector<1x196xf32>
    %c5 = arith.constant 5 : index
    %c0_42 = arith.constant 0 : index
    %c0_43 = arith.constant 0 : index
    %58 = vector.load %arg4[%c5, %c0_42, %c0_43] : memref<8x5x196xf32, #tpu.memory_space<vmem>>, vector<1x5x196xf32>
    %59 = vector.shape_cast %58 : vector<1x5x196xf32> to vector<5x196xf32>
    %cst_44 = arith.constant dense<0.000000e+00> : vector<1x5xf32>
    %60 = tpu.matmul %57, %59, %cst_44 {dimension_numbers = #tpu.dot_dimension_numbers<[1], [1], [0], [0], [0, 0, 1, 0], [], []>} : vector<1x196xf32>, vector<5x196xf32>, vector<1x5xf32> -> vector<1x5xf32>
    %61 = arith.addf %56, %60 : vector<1x5xf32>
    %62 = vector.extract_strided_slice %32 {offsets = [6, 0], sizes = [1, 196], strides = [1, 1]} : vector<8x196xf32> to vector<1x196xf32>
    %c6 = arith.constant 6 : index
    %c0_45 = arith.constant 0 : index
    %c0_46 = arith.constant 0 : index
    %63 = vector.load %arg4[%c6, %c0_45, %c0_46] : memref<8x5x196xf32, #tpu.memory_space<vmem>>, vector<1x5x196xf32>
    %64 = vector.shape_cast %63 : vector<1x5x196xf32> to vector<5x196xf32>
    %cst_47 = arith.constant dense<0.000000e+00> : vector<1x5xf32>
    %65 = tpu.matmul %62, %64, %cst_47 {dimension_numbers = #tpu.dot_dimension_numbers<[1], [1], [0], [0], [0, 0, 1, 0], [], []>} : vector<1x196xf32>, vector<5x196xf32>, vector<1x5xf32> -> vector<1x5xf32>
    %66 = arith.addf %61, %65 : vector<1x5xf32>
    %67 = vector.extract_strided_slice %32 {offsets = [7, 0], sizes = [1, 196], strides = [1, 1]} : vector<8x196xf32> to vector<1x196xf32>
    %c7 = arith.constant 7 : index
    %c0_48 = arith.constant 0 : index
    %c0_49 = arith.constant 0 : index
    %68 = vector.load %arg4[%c7, %c0_48, %c0_49] : memref<8x5x196xf32, #tpu.memory_space<vmem>>, vector<1x5x196xf32>
    %69 = vector.shape_cast %68 : vector<1x5x196xf32> to vector<5x196xf32>
    %cst_50 = arith.constant dense<0.000000e+00> : vector<1x5xf32>
    %70 = tpu.matmul %67, %69, %cst_50 {dimension_numbers = #tpu.dot_dimension_numbers<[1], [1], [0], [0], [0, 0, 1, 0], [], []>} : vector<1x196xf32>, vector<5x196xf32>, vector<1x5xf32> -> vector<1x5xf32>
    %71 = arith.addf %66, %70 : vector<1x5xf32>
    %c0_51 = arith.constant 0 : index
    %c0_52 = arith.constant 0 : index
    %72 = vector.load %arg5[%c0_51, %c0_52] : memref<1x5xf32, #tpu.memory_space<vmem>>, vector<1x5xf32>
    %73 = arith.addf %71, %72 : vector<1x5xf32>
    %c0_53 = arith.constant 0 : index
    %c0_54 = arith.constant 0 : index
    %c0_55 = arith.constant 0 : index
    %74 = vector.load %arg6[%c0_53, %c0_54, %c0_55] : memref<1x1x5xf32, #tpu.memory_space<vmem>>, vector<1x1x5xf32>
    %75 = vector.shape_cast %74 : vector<1x1x5xf32> to vector<1x5xf32>
    %76 = vector.shape_cast %73 : vector<1x5xf32> to vector<1x1x5xf32>
    tpu.vector_store %arg6[%c0_53, %c0_54, %c0_55], %76 {strides = array<i32>} : memref<1x1x5xf32, #tpu.memory_space<vmem>>, vector<1x1x5xf32>,
    return
  }
  func.func @transform_0(%arg0: i32) -> (i32, i32, i32, i32) {
    %c0_i32 = arith.constant 0 : i32
    %c0_i32_0 = arith.constant 0 : i32
    %c0_i32_1 = arith.constant 0 : i32
    %c0_i32_2 = arith.constant 0 : i32
    return %arg0, %c0_i32, %c0_i32_0, %c0_i32_1 : i32, i32, i32, i32
  }
  func.func @transform_1(%arg0: i32) -> (i32, i32) {
    %c0_i32 = arith.constant 0 : i32
    %c0_i32_0 = arith.constant 0 : i32
    %c0_i32_1 = arith.constant 0 : i32
    return %c0_i32, %c0_i32_0 : i32, i32
  }
  func.func @transform_2(%arg0: i32) -> (i32, i32) {
    %c0_i32 = arith.constant 0 : i32
    %c0_i32_0 = arith.constant 0 : i32
    %c0_i32_1 = arith.constant 0 : i32
    return %c0_i32, %c0_i32_0 : i32, i32
  }
  func.func @transform_3(%arg0: i32) -> (i32, i32, i32) {
    %c0_i32 = arith.constant 0 : i32
    %c0_i32_0 = arith.constant 0 : i32
    %c0_i32_1 = arith.constant 0 : i32
    %c0_i32_2 = arith.constant 0 : i32
    return %c0_i32, %c0_i32_0, %c0_i32_1 : i32, i32, i32
  }
  func.func @transform_4(%arg0: i32) -> (i32, i32) {
    %c0_i32 = arith.constant 0 : i32
    %c0_i32_0 = arith.constant 0 : i32
    %c0_i32_1 = arith.constant 0 : i32
    return %c0_i32, %c0_i32_0 : i32, i32
  }
  func.func @transform_5(%arg0: i32) -> (i32, i32, i32) {
    %c0_i32 = arith.constant 0 : i32
    %c0_i32_0 = arith.constant 0 : i32
    %c0_i32_1 = arith.constant 0 : i32
    return %arg0, %c0_i32, %c0_i32_0 : i32, i32, i32
  }
}

</mosaic_0001>

<llo_original>
// kernel: simple_cnn_forward.1
$region0: #{simple_cnn_forward.1}
  #allocation0 [shape = 'u32[]', space=smem, size = 0x4, offset = 0x4, fixed_abs, tag = 'smem constant byte address 0x4 - core index']
  #allocation1 [shape = 'u32[72,128]{1,0:T(1,128)}', space=vmem, size = 0x9000, scoped, tag = 'internal scratch']
  %s0 = inlined_call_operand.vmem [shape: f32[2,4,27,196], index: 0, kind: input, shape index: {}]
  %s1 = inlined_call_operand.vmem [shape: f32[8,27], index: 1, kind: input, shape index: {}]
  %s2 = inlined_call_operand.vmem [shape: f32[8,1], index: 2, kind: input, shape index: {}]
  %s3 = inlined_call_operand.vmem [shape: f32[8,5,196], index: 3, kind: input, shape index: {}]
  %s4 = inlined_call_operand.vmem [shape: f32[1,5], index: 4, kind: input, shape index: {}]
  %s5 = inlined_call_operand.hbm [shape: f32[2,1,5], index: 5, kind: output, shape index: {}]
  %s6 = sld [smem:[#allocation0]]
  $region53: #{simple_cnn_forward.1} parent=0
    _
  %s8 = ssub.s32 1, %s6
  %s9 = scalar_select 0, %s8, %s6
  $region1: #{simple_cnn_forward.1} parent=0
    #allocation2 [shape = 'u8[1024]{0}', space=vmem, size = 0x400, scoped, tag = 'output window, operand 0']
    #allocation3 [shape = 's32[2]{0}', space=sflag, size = 0x8, scoped, tag = 'scoped memory for simple_cnn_forward.1']
    %10 = vsyncpa [#allocation3], 0
    %s11 = scalar_lea.sflag [#allocation3], 1
    %12 = vsyncpa %s11, 0
    loop: start=0, step=1, limit=4
    $region2: #{simple_cnn_forward.1} parent=1 // loop_pre_header
      _
    $region3: #{simple_cnn_forward.1} parent=1 // loop_header
      %s14 = sphi 0, %s18
      %p15 = scmp.ge.s32.totalorder %s14, 4
      %s24 = sphi 0, %s26
      %s27 = sphi 0, %s24
      %s28 = sphi 0, %s27
      %s44 = sphi 0, %s28
      %s48 = sphi 0, %s48
      %s50 = sphi 0, %s48
      %s51 = sphi 0, %s50
      %s65 = sphi 0, %s51
      %s69 = sphi 0, %s69
      %s71 = sphi 0, %s69
      %s72 = sphi 0, %s71
      %s86 = sphi 0, %s72
      %s90 = sphi 0, %s90
      %s92 = sphi 0, %s90
      %s93 = sphi 0, %s92
      %s107 = sphi 0, %s93
      %s111 = sphi 0, %s111
      %s113 = sphi 0, %s111
      %s114 = sphi 0, %s113
      %s128 = sphi 0, %s114
      %s134 = sphi 0, %s136
      %s137 = sphi 0, %s134
      %s138 = sphi 0, %s137
      %s154 = sphi 0, %s138
    $region4: #{simple_cnn_forward.1} parent=1 // loop_header_branch
      %17 = sbr.rel (%p15) target = $region8
    $region5: #{simple_cnn_forward.1} parent=1 // loop_body
      %s19 = ssub.s32 %s14, 1
      %s20 = ssub.s32 %s14, 2
      %s21 = sadd.s32 %s14, 1
      %s22 = ssub.s32 %s14, %s21
      %p23 = scmp.eq.s32.totalorder %s22, 0
      %s25 = sadd.s32 %s24, 1
      %s26 = scalar_select %p23, %s24, %s25
      %p29 = pneg %p23
      %p30 = scmp.eq.s32.totalorder %s14, 1
      %p31 = por %p29, %p30
      %p32 = scmp.ne.s32.totalorder %s24, %s27
      %p33 = scmp.eq.s32.totalorder %s14, 0
      %p34 = por %p32, %p33
      %p35 = scmp.ne.s32.totalorder %s24, %s27
      %p36 = scmp.eq.s32.totalorder %s19, 1
      %p37 = por %p35, %p36
      %p38 = scmp.ne.s32.totalorder %s27, %s28
      %p39 = scmp.eq.s32.totalorder %s19, 0
      %p40 = por %p38, %p39
      %p41 = scmp.ne.s32.totalorder %s27, %s28
      %p42 = scmp.eq.s32.totalorder %s20, 1
      %p43 = por %p41, %p42
      %p45 = scmp.ne.s32.totalorder %s28, %s44
      %p46 = scmp.eq.s32.totalorder %s20, 0
      %p47 = por %p45, %p46
      %s49 = sadd.s32 %s48, 1
      %p52 = scmp.eq.s32.totalorder %s14, 1
      %p53 = scmp.ne.s32.totalorder %s48, %s50
      %p54 = scmp.eq.s32.totalorder %s14, 0
      %p55 = por %p53, %p54
      %p56 = scmp.ne.s32.totalorder %s48, %s50
      %p57 = scmp.eq.s32.totalorder %s19, 1
      %p58 = por %p56, %p57
      %p59 = scmp.ne.s32.totalorder %s50, %s51
      %p60 = scmp.eq.s32.totalorder %s19, 0
      %p61 = por %p59, %p60
      %p62 = scmp.ne.s32.totalorder %s50, %s51
      %p63 = scmp.eq.s32.totalorder %s20, 1
      %p64 = por %p62, %p63
      %p66 = scmp.ne.s32.totalorder %s51, %s65
      %p67 = scmp.eq.s32.totalorder %s20, 0
      %p68 = por %p66, %p67
      %s70 = sadd.s32 %s69, 1
      %p73 = scmp.eq.s32.totalorder %s14, 1
      %p74 = scmp.ne.s32.totalorder %s69, %s71
      %p75 = scmp.eq.s32.totalorder %s14, 0
      %p76 = por %p74, %p75
      %p77 = scmp.ne.s32.totalorder %s69, %s71
      %p78 = scmp.eq.s32.totalorder %s19, 1
      %p79 = por %p77, %p78
      %p80 = scmp.ne.s32.totalorder %s71, %s72
      %p81 = scmp.eq.s32.totalorder %s19, 0
      %p82 = por %p80, %p81
      %p83 = scmp.ne.s32.totalorder %s71, %s72
      %p84 = scmp.eq.s32.totalorder %s20, 1
      %p85 = por %p83, %p84
      %p87 = scmp.ne.s32.totalorder %s72, %s86
      %p88 = scmp.eq.s32.totalorder %s20, 0
      %p89 = por %p87, %p88
      %s91 = sadd.s32 %s90, 1
      %p94 = scmp.eq.s32.totalorder %s14, 1
      %p95 = scmp.ne.s32.totalorder %s90, %s92
      %p96 = scmp.eq.s32.totalorder %s14, 0
      %p97 = por %p95, %p96
      %p98 = scmp.ne.s32.totalorder %s90, %s92
      %p99 = scmp.eq.s32.totalorder %s19, 1
      %p100 = por %p98, %p99
      %p101 = scmp.ne.s32.totalorder %s92, %s93
      %p102 = scmp.eq.s32.totalorder %s19, 0
      %p103 = por %p101, %p102
      %p104 = scmp.ne.s32.totalorder %s92, %s93
      %p105 = scmp.eq.s32.totalorder %s20, 1
      %p106 = por %p104, %p105
      %p108 = scmp.ne.s32.totalorder %s93, %s107
      %p109 = scmp.eq.s32.totalorder %s20, 0
      %p110 = por %p108, %p109
      %s112 = sadd.s32 %s111, 1
      %p115 = scmp.eq.s32.totalorder %s14, 1
      %p116 = scmp.ne.s32.totalorder %s111, %s113
      %p117 = scmp.eq.s32.totalorder %s14, 0
      %p118 = por %p116, %p117
      %p119 = scmp.ne.s32.totalorder %s111, %s113
      %p120 = scmp.eq.s32.totalorder %s19, 1
      %p121 = por %p119, %p120
      %p122 = scmp.ne.s32.totalorder %s113, %s114
      %p123 = scmp.eq.s32.totalorder %s19, 0
      %p124 = por %p122, %p123
      %p125 = scmp.ne.s32.totalorder %s113, %s114
      %p126 = scmp.eq.s32.totalorder %s20, 1
      %p127 = por %p125, %p126
      %p129 = scmp.ne.s32.totalorder %s114, %s128
      %p130 = scmp.eq.s32.totalorder %s20, 0
      %p131 = por %p129, %p130
      %s132 = ssub.s32 %s14, %s21
      %p133 = scmp.eq.s32.totalorder %s132, 0
      %s135 = sadd.s32 %s134, 1
      %s136 = scalar_select %p133, %s134, %s135
      %p139 = pneg %p133
      %p140 = scmp.eq.s32.totalorder %s14, 1
      %p141 = por %p139, %p140
      %p142 = scmp.ne.s32.totalorder %s134, %s137
      %p143 = scmp.eq.s32.totalorder %s14, 0
      %p144 = por %p142, %p143
      %p145 = scmp.ne.s32.totalorder %s134, %s137
      %p146 = scmp.eq.s32.totalorder %s19, 1
      %p147 = por %p145, %p146
      %p148 = scmp.ne.s32.totalorder %s137, %s138
      %p149 = scmp.eq.s32.totalorder %s19, 0
      %p150 = por %p148, %p149
      %p151 = scmp.ne.s32.totalorder %s137, %s138
      %p152 = scmp.eq.s32.totalorder %s20, 1
      %p153 = por %p151, %p152
      %p155 = scmp.ne.s32.totalorder %s138, %s154
      %p156 = scmp.eq.s32.totalorder %s20, 0
      %p157 = por %p155, %p156
      %p158 = scmp.le.s32.totalorder 1, %s14
      %p159 = scmp.lt.s32.totalorder %s14, 3
      %p160 = pnand %p158, %p159
      %p161 = pneg %p160
      // Predicated region
      $region9: #{simple_cnn_forward.1} parent=5 // pred_check
        _
      $region10: #{simple_cnn_forward.1} parent=5 // pred_check_branch
        %163 = sbr.rel (%p160) target = $region12
      $region11: #{simple_cnn_forward.1} parent=5 // pred_region
        %s164 = ssub.s32 %s14, 1
        // Predicated region
        $region13: #{simple_cnn_forward.1} parent=11 // pred_check
          %p165 = pneg %p61
        $region14: #{simple_cnn_forward.1} parent=11 // pred_check_branch
          %167 = sbr.rel (%p165) target = $region16
        $region15: #{simple_cnn_forward.1} parent=11 // pred_region
          _
        $region16: #{simple_cnn_forward.1} parent=11 // pred_fallthru
          _
        // Predicated region
        $region17: #{simple_cnn_forward.1} parent=11 // pred_check
          %p168 = pneg %p82
        $region18: #{simple_cnn_forward.1} parent=11 // pred_check_branch
          %170 = sbr.rel (%p168) target = $region20
        $region19: #{simple_cnn_forward.1} parent=11 // pred_region
          _
        $region20: #{simple_cnn_forward.1} parent=11 // pred_fallthru
          _
        // Predicated region
        $region21: #{simple_cnn_forward.1} parent=11 // pred_check
          %p171 = pneg %p103
        $region22: #{simple_cnn_forward.1} parent=11 // pred_check_branch
          %173 = sbr.rel (%p171) target = $region24
        $region23: #{simple_cnn_forward.1} parent=11 // pred_region
          _
        $region24: #{simple_cnn_forward.1} parent=11 // pred_fallthru
          _
        // Predicated region
        $region25: #{simple_cnn_forward.1} parent=11 // pred_check
          %p174 = pneg %p124
        $region26: #{simple_cnn_forward.1} parent=11 // pred_check_branch
          %176 = sbr.rel (%p174) target = $region28
        $region27: #{simple_cnn_forward.1} parent=11 // pred_region
          _
        $region28: #{simple_cnn_forward.1} parent=11 // pred_fallthru
          _
      $region12: #{simple_cnn_forward.1} parent=5 // pred_fallthru
        _
      %p177 = scmp.lt.s32.totalorder %s14, 2
      // Predicated region
      $region29: #{simple_cnn_forward.1} parent=5 // pred_check
        %p178 = pneg %p177
      $region30: #{simple_cnn_forward.1} parent=5 // pred_check_branch
        %180 = sbr.rel (%p178) target = $region32
      $region31: #{simple_cnn_forward.1} parent=5 // pred_region
        // Predicated region
        $region33: #{simple_cnn_forward.1} parent=31 // pred_check
          %p181 = pneg %p34
        $region34: #{simple_cnn_forward.1} parent=31 // pred_check_branch
          %183 = sbr.rel (%p181) target = $region36
        $region35: #{simple_cnn_forward.1} parent=31 // pred_region
          %p184 = scmp.lt.s32.totalorder %s14, 1
          %s185 = scalar_select %p184, %s14, 1
          %s186 = smul.addr %s185, 32
          %s187 = smul.addr %s186, 8
          %s188 = scalar_lea.vmem %s0, %s187
        $region36: #{simple_cnn_forward.1} parent=31 // pred_fallthru
          _
      $region32: #{simple_cnn_forward.1} parent=5 // pred_fallthru
        _
      %p189 = scmp.le.s32.totalorder 1, %s14
      %p190 = scmp.lt.s32.totalorder %s14, 3
      %p191 = pnand %p189, %p190
      %p192 = pneg %p191
      // Predicated region
      $region37: #{simple_cnn_forward.1} parent=5 // pred_check
        _
      $region38: #{simple_cnn_forward.1} parent=5 // pred_check_branch
        %194 = sbr.rel (%p191) target = $region40
      $region39: #{simple_cnn_forward.1} parent=5 // pred_region
        %s195 = ssub.s32 %s14, 1
        %p196 = scmp.lt.s32.totalorder %s19, 1
        %s197 = scalar_select %p196, %s19, 1
        %s198 = smul.addr %s197, 32
        %s199 = smul.addr %s198, 8
        %s200 = scalar_lea.vmem %s0, %s199
        %p201 = pneg %p40
        %p202 = pneg %p37
        %p203 = pneg %p61
        %p204 = pneg %p58
        %p205 = pneg %p82
        %p206 = pneg %p79
        %p207 = pneg %p103
        %p208 = pneg %p100
        %p209 = pneg %p124
        %p210 = pneg %p121
        %p211 = pneg %p150
        %p212 = pneg %p147
        %s213 = sand.u32 %s137, 1
        %s214 = scalar_lea.sflag [#allocation3], %s213
        %s215 = sand.u32 %s137, 1
        %s216 = scalar_lea.vmem [#allocation2], %s215
        %p217 = scmp.lt.s32.totalorder %s19, 1
        %s218 = scalar_select %p217, %s19, 1
        %s219 = smul.addr %s218, 32
        %s220 = smul.addr %s219, 8
        %s221 = scalar_lea.vmem %s0, %s220
        %v222 = vld [vmem:[%s1] sm:$0xff]
        %v223 = vld [vmem:[%s2] sm:$0xff]
        %v224 = vld [vmem:[%s221] sm:$0xff]
        %v225 = vld [vmem:[%s221 + $0x8] sm:$0xff]
        %v226 = vld [vmem:[%s221 + $0x10] sm:$0xff]
        %v227 = vld [vmem:[%s221 + $0x18] sm:$0xff]
        %v228 = vld [vmem:[%s221 + $0x20] sm:$0xff]
        %v229 = vld [vmem:[%s221 + $0x28] sm:$0xff]
        %v230 = vld [vmem:[%s221 + $0x30] sm:$0x7]
        %v231 = vld [vmem:[%s221 + $0x38] sm:$0x7]
        %233 = vset.pattern.permute.xlu0 0
        %234 = vperm.xlu0 %233, %v223
        %v235 = vpop.permute.xlu0 %234
        %vm237 = vcmask 220160
        %v239 = vsel %vm237, %v222, 0
        %vm241 = vcmask 1042432
        %v243 = vsel %vm241, %v230, 0
        %v246 = vsel %vm241, %v231, 0
        %248 = vmatpush.msra.mxu0 0.0
        %249 = vmatpush.msra.mxu0 0.0
        %250 = vmatpush.msra.mxu0 0.0
        %251 = vmatpush.msra.mxu0 0.0
        %252 = vmatpush.msra.mxu0 0.0
        %253 = vmatpush.msra.mxu0 0.0
        %254 = vmatpush.msra.mxu0 0.0
        %255 = vmatpush.msra.mxu0 0.0
        %256 = vmatpush.msra.mxu0 0.0
        %257 = vmatpush.msra.mxu0 0.0
        %258 = vmatpush.msra.mxu0 0.0
        %259 = vmatpush.msra.mxu0 0.0
        %260 = vmatpush.msra.mxu0 %v243
        %261 = vmatpush.msra.mxu0 %v228
        %262 = vmatpush.msra.mxu0 %v226
        %263 = vmatpush.msra.mxu0 %v224
        %264 = vmatmul.f32.gmra.mxu0 %v239
        %v265 = vpop.f32.mrf.mxu0
        %v266 = vadd.f32 %v235, %v265
        %267 = vdwg.mxu0
        %268 = vmatpush.msra.mxu0 0.0
        %269 = vmatpush.msra.mxu0 0.0
        %270 = vmatpush.msra.mxu0 0.0
        %271 = vmatpush.msra.mxu0 0.0
        %272 = vmatpush.msra.mxu0 0.0
        %273 = vmatpush.msra.mxu0 0.0
        %274 = vmatpush.msra.mxu0 0.0
        %275 = vmatpush.msra.mxu0 0.0
        %276 = vmatpush.msra.mxu0 0.0
        %277 = vmatpush.msra.mxu0 0.0
        %278 = vmatpush.msra.mxu0 0.0
        %279 = vmatpush.msra.mxu0 0.0
        %280 = vmatpush.msra.mxu0 %v246
        %281 = vmatpush.msra.mxu0 %v229
        %282 = vmatpush.msra.mxu0 %v227
        %283 = vmatpush.msra.mxu0 %v225
        %284 = vmatmul.f32.gmra.mxu0 %v239
        %v285 = vpop.f32.mrf.mxu0
        %v286 = vadd.f32 %v235, %v285
        %287 = vdwg.mxu0
        %v288 = vmax.f32 %v266, 0.0
        %v289 = vmax.f32 %v286, 0.0
        %s290 = scalar_lea.vmem %s221, 64
        %v291 = vld [vmem:[%s290] sm:$0xff]
        %v292 = vld [vmem:[%s290 + $0x8] sm:$0xff]
        %v293 = vld [vmem:[%s290 + $0x10] sm:$0xff]
        %v294 = vld [vmem:[%s290 + $0x18] sm:$0xff]
        %v295 = vld [vmem:[%s290 + $0x20] sm:$0xff]
        %v296 = vld [vmem:[%s290 + $0x28] sm:$0xff]
        %v297 = vld [vmem:[%s290 + $0x30] sm:$0x7]
        %v298 = vld [vmem:[%s290 + $0x38] sm:$0x7]
        %v300 = vsel %vm241, %v297, 0
        %v303 = vsel %vm241, %v298, 0
        %305 = vmatpush.msra.mxu0 0.0
        %306 = vmatpush.msra.mxu0 0.0
        %307 = vmatpush.msra.mxu0 0.0
        %308 = vmatpush.msra.mxu0 0.0
        %309 = vmatpush.msra.mxu0 0.0
        %310 = vmatpush.msra.mxu0 0.0
        %311 = vmatpush.msra.mxu0 0.0
        %312 = vmatpush.msra.mxu0 0.0
        %313 = vmatpush.msra.mxu0 0.0
        %314 = vmatpush.msra.mxu0 0.0
        %315 = vmatpush.msra.mxu0 0.0
        %316 = vmatpush.msra.mxu0 0.0
        %317 = vmatpush.msra.mxu0 %v300
        %318 = vmatpush.msra.mxu0 %v295
        %319 = vmatpush.msra.mxu0 %v293
        %320 = vmatpush.msra.mxu0 %v291
        %321 = vmatmul.f32.gmra.mxu0 %v239
        %v322 = vpop.f32.mrf.mxu0
        %v323 = vadd.f32 %v235, %v322
        %324 = vdwg.mxu0
        %325 = vmatpush.msra.mxu0 0.0
        %326 = vmatpush.msra.mxu0 0.0
        %327 = vmatpush.msra.mxu0 0.0
        %328 = vmatpush.msra.mxu0 0.0
        %329 = vmatpush.msra.mxu0 0.0
        %330 = vmatpush.msra.mxu0 0.0
        %331 = vmatpush.msra.mxu0 0.0
        %332 = vmatpush.msra.mxu0 0.0
        %333 = vmatpush.msra.mxu0 0.0
        %334 = vmatpush.msra.mxu0 0.0
        %335 = vmatpush.msra.mxu0 0.0
        %336 = vmatpush.msra.mxu0 0.0
        %337 = vmatpush.msra.mxu0 %v303
        %338 = vmatpush.msra.mxu0 %v296
        %339 = vmatpush.msra.mxu0 %v294
        %340 = vmatpush.msra.mxu0 %v292
        %341 = vmatmul.f32.gmra.mxu0 %v239
        %v342 = vpop.f32.mrf.mxu0
        %v343 = vadd.f32 %v235, %v342
        %344 = vdwg.mxu0
        %v345 = vmax.f32 %v323, 0.0
        %v346 = vmax.f32 %v343, 0.0
        %v347 = vmax.f32 %v288, %v345
        %v348 = vmax.f32 %v289, %v346
        %s349 = scalar_lea.vmem %s221, 128
        %v350 = vld [vmem:[%s349] sm:$0xff]
        %v351 = vld [vmem:[%s349 + $0x8] sm:$0xff]
        %v352 = vld [vmem:[%s349 + $0x10] sm:$0xff]
        %v353 = vld [vmem:[%s349 + $0x18] sm:$0xff]
        %v354 = vld [vmem:[%s349 + $0x20] sm:$0xff]
        %v355 = vld [vmem:[%s349 + $0x28] sm:$0xff]
        %v356 = vld [vmem:[%s349 + $0x30] sm:$0x7]
        %v357 = vld [vmem:[%s349 + $0x38] sm:$0x7]
        %v359 = vsel %vm241, %v356, 0
        %v362 = vsel %vm241, %v357, 0
        %364 = vmatpush.msra.mxu0 0.0
        %365 = vmatpush.msra.mxu0 0.0
        %366 = vmatpush.msra.mxu0 0.0
        %367 = vmatpush.msra.mxu0 0.0
        %368 = vmatpush.msra.mxu0 0.0
        %369 = vmatpush.msra.mxu0 0.0
        %370 = vmatpush.msra.mxu0 0.0
        %371 = vmatpush.msra.mxu0 0.0
        %372 = vmatpush.msra.mxu0 0.0
        %373 = vmatpush.msra.mxu0 0.0
        %374 = vmatpush.msra.mxu0 0.0
        %375 = vmatpush.msra.mxu0 0.0
        %376 = vmatpush.msra.mxu0 %v359
        %377 = vmatpush.msra.mxu0 %v354
        %378 = vmatpush.msra.mxu0 %v352
        %379 = vmatpush.msra.mxu0 %v350
        %380 = vmatmul.f32.gmra.mxu0 %v239
        %v381 = vpop.f32.mrf.mxu0
        %v382 = vadd.f32 %v235, %v381
        %383 = vdwg.mxu0
        %384 = vmatpush.msra.mxu0 0.0
        %385 = vmatpush.msra.mxu0 0.0
        %386 = vmatpush.msra.mxu0 0.0
        %387 = vmatpush.msra.mxu0 0.0
        %388 = vmatpush.msra.mxu0 0.0
        %389 = vmatpush.msra.mxu0 0.0
        %390 = vmatpush.msra.mxu0 0.0
        %391 = vmatpush.msra.mxu0 0.0
        %392 = vmatpush.msra.mxu0 0.0
        %393 = vmatpush.msra.mxu0 0.0
        %394 = vmatpush.msra.mxu0 0.0
        %395 = vmatpush.msra.mxu0 0.0
        %396 = vmatpush.msra.mxu0 %v362
        %397 = vmatpush.msra.mxu0 %v355
        %398 = vmatpush.msra.mxu0 %v353
        %399 = vmatpush.msra.mxu0 %v351
        %400 = vmatmul.f32.gmra.mxu0 %v239
        %v401 = vpop.f32.mrf.mxu0
        %v402 = vadd.f32 %v235, %v401
        %403 = vdwg.mxu0
        %v404 = vmax.f32 %v382, 0.0
        %v405 = vmax.f32 %v402, 0.0
        %v406 = vmax.f32 %v347, %v404
        %v407 = vmax.f32 %v348, %v405
        %s408 = scalar_lea.vmem %s221, 192
        %v409 = vld [vmem:[%s408] sm:$0xff]
        %v410 = vld [vmem:[%s408 + $0x8] sm:$0xff]
        %v411 = vld [vmem:[%s408 + $0x10] sm:$0xff]
        %v412 = vld [vmem:[%s408 + $0x18] sm:$0xff]
        %v413 = vld [vmem:[%s408 + $0x20] sm:$0xff]
        %v414 = vld [vmem:[%s408 + $0x28] sm:$0xff]
        %v415 = vld [vmem:[%s408 + $0x30] sm:$0x7]
        %v416 = vld [vmem:[%s408 + $0x38] sm:$0x7]
        %v418 = vsel %vm241, %v415, 0
        %v421 = vsel %vm241, %v416, 0
        %423 = vmatpush.msra.mxu0 0.0
        %424 = vmatpush.msra.mxu0 0.0
        %425 = vmatpush.msra.mxu0 0.0
        %426 = vmatpush.msra.mxu0 0.0
        %427 = vmatpush.msra.mxu0 0.0
        %428 = vmatpush.msra.mxu0 0.0
        %429 = vmatpush.msra.mxu0 0.0
        %430 = vmatpush.msra.mxu0 0.0
        %431 = vmatpush.msra.mxu0 0.0
        %432 = vmatpush.msra.mxu0 0.0
        %433 = vmatpush.msra.mxu0 0.0
        %434 = vmatpush.msra.mxu0 0.0
        %435 = vmatpush.msra.mxu0 %v418
        %436 = vmatpush.msra.mxu0 %v413
        %437 = vmatpush.msra.mxu0 %v411
        %438 = vmatpush.msra.mxu0 %v409
        %439 = vmatmul.f32.gmra.mxu0 %v239
        %v440 = vpop.f32.mrf.mxu0
        %v441 = vadd.f32 %v235, %v440
        %442 = vdwg.mxu0
        %443 = vmatpush.msra.mxu0 0.0
        %444 = vmatpush.msra.mxu0 0.0
        %445 = vmatpush.msra.mxu0 0.0
        %446 = vmatpush.msra.mxu0 0.0
        %447 = vmatpush.msra.mxu0 0.0
        %448 = vmatpush.msra.mxu0 0.0
        %449 = vmatpush.msra.mxu0 0.0
        %450 = vmatpush.msra.mxu0 0.0
        %451 = vmatpush.msra.mxu0 0.0
        %452 = vmatpush.msra.mxu0 0.0
        %453 = vmatpush.msra.mxu0 0.0
        %454 = vmatpush.msra.mxu0 0.0
        %455 = vmatpush.msra.mxu0 %v421
        %456 = vmatpush.msra.mxu0 %v414
        %457 = vmatpush.msra.mxu0 %v412
        %458 = vmatpush.msra.mxu0 %v410
        %459 = vmatmul.f32.gmra.mxu0 %v239
        %v460 = vpop.f32.mrf.mxu0
        %v461 = vadd.f32 %v235, %v460
        %462 = vdwg.mxu0
        %v463 = vmax.f32 %v441, 0.0
        %v464 = vmax.f32 %v461, 0.0
        %v465 = vmax.f32 %v406, %v463
        %v466 = vmax.f32 %v407, %v464
        %v467 = vld [vmem:[%s3] sm:$0x1f]
        %v468 = vld [vmem:[%s3 + $0x8] sm:$0x1f]
        %s469 = scalar_lea.vmem %s3, 16
        %v470 = vld [vmem:[%s469] sm:$0x1f]
        %v471 = vld [vmem:[%s469 + $0x8] sm:$0x1f]
        %v474 = vrot.slane %v465, 1
        %v475 = vrot.slane %v466, 1
        %vm477 = vcmask 556032
        %v478 = vsel %vm477, %v475, 0
        %v481 = vsel %vm477, %v471, 0
        %483 = vmatpush.xpose.msra.mxu0 0.0
        %484 = vmatpush.xpose.msra.mxu0 0.0
        %485 = vmatpush.xpose.msra.mxu0 0.0
        %486 = vmatpush.xpose.msra.mxu0 0.0
        %487 = vmatpush.xpose.msra.mxu0 0.0
        %488 = vmatpush.xpose.msra.mxu0 0.0
        %489 = vmatpush.xpose.msra.mxu0 0.0
        %490 = vmatpush.xpose.msra.mxu0 0.0
        %491 = vmatpush.xpose.msra.mxu0 0.0
        %492 = vmatpush.xpose.msra.mxu0 0.0
        %493 = vmatpush.xpose.msra.mxu0 0.0
        %494 = vmatpush.xpose.msra.mxu0 0.0
        %495 = vmatpush.xpose.msra.mxu0 0.0
        %496 = vmatpush.xpose.msra.mxu0 0.0
        %497 = vmatpush.xpose.msra.mxu0 0.0
        %498 = vmatpush.xpose.msra.mxu0 %v470
        %499 = vmatmul.f32.gmra.mxu0 %v474
        %v500 = vpop.f32.mrf.mxu0
        %v501 = vadd.f32 0.0, %v500
        %502 = vdwg.mxu0
        %503 = vmatpush.xpose.msra.mxu0 0.0
        %504 = vmatpush.xpose.msra.mxu0 0.0
        %505 = vmatpush.xpose.msra.mxu0 0.0
        %506 = vmatpush.xpose.msra.mxu0 0.0
        %507 = vmatpush.xpose.msra.mxu0 0.0
        %508 = vmatpush.xpose.msra.mxu0 0.0
        %509 = vmatpush.xpose.msra.mxu0 0.0
        %510 = vmatpush.xpose.msra.mxu0 0.0
        %511 = vmatpush.xpose.msra.mxu0 0.0
        %512 = vmatpush.xpose.msra.mxu0 0.0
        %513 = vmatpush.xpose.msra.mxu0 0.0
        %514 = vmatpush.xpose.msra.mxu0 0.0
        %515 = vmatpush.xpose.msra.mxu0 0.0
        %516 = vmatpush.xpose.msra.mxu0 0.0
        %517 = vmatpush.xpose.msra.mxu0 0.0
        %518 = vmatpush.xpose.msra.mxu0 %v481
        %519 = vmatmul.f32.gmra.mxu0 %v478
        %v520 = vpop.f32.mrf.mxu0
        %v521 = vadd.f32 %v501, %v520
        %522 = vdwg.mxu0
        %v523 = vsel %vm477, %v466, 0
        %v526 = vsel %vm477, %v468, 0
        %528 = vmatpush.xpose.msra.mxu0 0.0
        %529 = vmatpush.xpose.msra.mxu0 0.0
        %530 = vmatpush.xpose.msra.mxu0 0.0
        %531 = vmatpush.xpose.msra.mxu0 0.0
        %532 = vmatpush.xpose.msra.mxu0 0.0
        %533 = vmatpush.xpose.msra.mxu0 0.0
        %534 = vmatpush.xpose.msra.mxu0 0.0
        %535 = vmatpush.xpose.msra.mxu0 0.0
        %536 = vmatpush.xpose.msra.mxu0 0.0
        %537 = vmatpush.xpose.msra.mxu0 0.0
        %538 = vmatpush.xpose.msra.mxu0 0.0
        %539 = vmatpush.xpose.msra.mxu0 0.0
        %540 = vmatpush.xpose.msra.mxu0 0.0
        %541 = vmatpush.xpose.msra.mxu0 0.0
        %542 = vmatpush.xpose.msra.mxu0 0.0
        %543 = vmatpush.xpose.msra.mxu0 %v467
        %544 = vmatmul.f32.gmra.mxu0 %v465
        %v545 = vpop.f32.mrf.mxu0
        %v546 = vadd.f32 %v521, %v545
        %547 = vdwg.mxu0
        %548 = vmatpush.xpose.msra.mxu0 0.0
        %549 = vmatpush.xpose.msra.mxu0 0.0
        %550 = vmatpush.xpose.msra.mxu0 0.0
        %551 = vmatpush.xpose.msra.mxu0 0.0
        %552 = vmatpush.xpose.msra.mxu0 0.0
        %553 = vmatpush.xpose.msra.mxu0 0.0
        %554 = vmatpush.xpose.msra.mxu0 0.0
        %555 = vmatpush.xpose.msra.mxu0 0.0
        %556 = vmatpush.xpose.msra.mxu0 0.0
        %557 = vmatpush.xpose.msra.mxu0 0.0
        %558 = vmatpush.xpose.msra.mxu0 0.0
        %559 = vmatpush.xpose.msra.mxu0 0.0
        %560 = vmatpush.xpose.msra.mxu0 0.0
        %561 = vmatpush.xpose.msra.mxu0 0.0
        %562 = vmatpush.xpose.msra.mxu0 0.0
        %563 = vmatpush.xpose.msra.mxu0 %v526
        %564 = vmatmul.f32.gmra.mxu0 %v523
        %v565 = vpop.f32.mrf.mxu0
        %v566 = vadd.f32 %v546, %v565
        %567 = vdwg.mxu0
        %s568 = scalar_lea.vmem %s3, 32
        %v569 = vld [vmem:[%s568] sm:$0x1f]
        %v570 = vld [vmem:[%s568 + $0x8] sm:$0x1f]
        %v571 = vrot.slane %v465, 2
        %v572 = vrot.slane %v466, 2
        %v574 = vsel %vm477, %v572, 0
        %v577 = vsel %vm477, %v570, 0
        %579 = vmatpush.xpose.msra.mxu0 0.0
        %580 = vmatpush.xpose.msra.mxu0 0.0
        %581 = vmatpush.xpose.msra.mxu0 0.0
        %582 = vmatpush.xpose.msra.mxu0 0.0
        %583 = vmatpush.xpose.msra.mxu0 0.0
        %584 = vmatpush.xpose.msra.mxu0 0.0
        %585 = vmatpush.xpose.msra.mxu0 0.0
        %586 = vmatpush.xpose.msra.mxu0 0.0
        %587 = vmatpush.xpose.msra.mxu0 0.0
        %588 = vmatpush.xpose.msra.mxu0 0.0
        %589 = vmatpush.xpose.msra.mxu0 0.0
        %590 = vmatpush.xpose.msra.mxu0 0.0
        %591 = vmatpush.xpose.msra.mxu0 0.0
        %592 = vmatpush.xpose.msra.mxu0 0.0
        %593 = vmatpush.xpose.msra.mxu0 0.0
        %594 = vmatpush.xpose.msra.mxu0 %v569
        %595 = vmatmul.f32.gmra.mxu0 %v571
        %v596 = vpop.f32.mrf.mxu0
        %v597 = vadd.f32 0.0, %v596
        %598 = vdwg.mxu0
        %599 = vmatpush.xpose.msra.mxu0 0.0
        %600 = vmatpush.xpose.msra.mxu0 0.0
        %601 = vmatpush.xpose.msra.mxu0 0.0
        %602 = vmatpush.xpose.msra.mxu0 0.0
        %603 = vmatpush.xpose.msra.mxu0 0.0
        %604 = vmatpush.xpose.msra.mxu0 0.0
        %605 = vmatpush.xpose.msra.mxu0 0.0
        %606 = vmatpush.xpose.msra.mxu0 0.0
        %607 = vmatpush.xpose.msra.mxu0 0.0
        %608 = vmatpush.xpose.msra.mxu0 0.0
        %609 = vmatpush.xpose.msra.mxu0 0.0
        %610 = vmatpush.xpose.msra.mxu0 0.0
        %611 = vmatpush.xpose.msra.mxu0 0.0
        %612 = vmatpush.xpose.msra.mxu0 0.0
        %613 = vmatpush.xpose.msra.mxu0 0.0
        %614 = vmatpush.xpose.msra.mxu0 %v577
        %615 = vmatmul.f32.gmra.mxu0 %v574
        %v616 = vpop.f32.mrf.mxu0
        %v617 = vadd.f32 %v597, %v616
        %618 = vdwg.mxu0
        %v619 = vadd.f32 %v566, %v617
        %s620 = scalar_lea.vmem %s3, 48
        %v621 = vld [vmem:[%s620] sm:$0x1f]
        %v622 = vld [vmem:[%s620 + $0x8] sm:$0x1f]
        %v623 = vrot.slane %v465, 3
        %v624 = vrot.slane %v466, 3
        %v626 = vsel %vm477, %v624, 0
        %v629 = vsel %vm477, %v622, 0
        %631 = vmatpush.xpose.msra.mxu0 0.0
        %632 = vmatpush.xpose.msra.mxu0 0.0
        %633 = vmatpush.xpose.msra.mxu0 0.0
        %634 = vmatpush.xpose.msra.mxu0 0.0
        %635 = vmatpush.xpose.msra.mxu0 0.0
        %636 = vmatpush.xpose.msra.mxu0 0.0
        %637 = vmatpush.xpose.msra.mxu0 0.0
        %638 = vmatpush.xpose.msra.mxu0 0.0
        %639 = vmatpush.xpose.msra.mxu0 0.0
        %640 = vmatpush.xpose.msra.mxu0 0.0
        %641 = vmatpush.xpose.msra.mxu0 0.0
        %642 = vmatpush.xpose.msra.mxu0 0.0
        %643 = vmatpush.xpose.msra.mxu0 0.0
        %644 = vmatpush.xpose.msra.mxu0 0.0
        %645 = vmatpush.xpose.msra.mxu0 0.0
        %646 = vmatpush.xpose.msra.mxu0 %v621
        %647 = vmatmul.f32.gmra.mxu0 %v623
        %v648 = vpop.f32.mrf.mxu0
        %v649 = vadd.f32 0.0, %v648
        %650 = vdwg.mxu0
        %651 = vmatpush.xpose.msra.mxu0 0.0
        %652 = vmatpush.xpose.msra.mxu0 0.0
        %653 = vmatpush.xpose.msra.mxu0 0.0
        %654 = vmatpush.xpose.msra.mxu0 0.0
        %655 = vmatpush.xpose.msra.mxu0 0.0
        %656 = vmatpush.xpose.msra.mxu0 0.0
        %657 = vmatpush.xpose.msra.mxu0 0.0
        %658 = vmatpush.xpose.msra.mxu0 0.0
        %659 = vmatpush.xpose.msra.mxu0 0.0
        %660 = vmatpush.xpose.msra.mxu0 0.0
        %661 = vmatpush.xpose.msra.mxu0 0.0
        %662 = vmatpush.xpose.msra.mxu0 0.0
        %663 = vmatpush.xpose.msra.mxu0 0.0
        %664 = vmatpush.xpose.msra.mxu0 0.0
        %665 = vmatpush.xpose.msra.mxu0 0.0
        %666 = vmatpush.xpose.msra.mxu0 %v629
        %667 = vmatmul.f32.gmra.mxu0 %v626
        %v668 = vpop.f32.mrf.mxu0
        %v669 = vadd.f32 %v649, %v668
        %670 = vdwg.mxu0
        %v671 = vadd.f32 %v619, %v669
        %s672 = scalar_lea.vmem %s3, 64
        %v673 = vld [vmem:[%s672] sm:$0x1f]
        %v674 = vld [vmem:[%s672 + $0x8] sm:$0x1f]
        %v675 = vrot.slane %v465, 4
        %v676 = vrot.slane %v466, 4
        %v678 = vsel %vm477, %v676, 0
        %v681 = vsel %vm477, %v674, 0
        %683 = vmatpush.xpose.msra.mxu0 0.0
        %684 = vmatpush.xpose.msra.mxu0 0.0
        %685 = vmatpush.xpose.msra.mxu0 0.0
        %686 = vmatpush.xpose.msra.mxu0 0.0
        %687 = vmatpush.xpose.msra.mxu0 0.0
        %688 = vmatpush.xpose.msra.mxu0 0.0
        %689 = vmatpush.xpose.msra.mxu0 0.0
        %690 = vmatpush.xpose.msra.mxu0 0.0
        %691 = vmatpush.xpose.msra.mxu0 0.0
        %692 = vmatpush.xpose.msra.mxu0 0.0
        %693 = vmatpush.xpose.msra.mxu0 0.0
        %694 = vmatpush.xpose.msra.mxu0 0.0
        %695 = vmatpush.xpose.msra.mxu0 0.0
        %696 = vmatpush.xpose.msra.mxu0 0.0
        %697 = vmatpush.xpose.msra.mxu0 0.0
        %698 = vmatpush.xpose.msra.mxu0 %v673
        %699 = vmatmul.f32.gmra.mxu0 %v675
        %v700 = vpop.f32.mrf.mxu0
        %v701 = vadd.f32 0.0, %v700
        %702 = vdwg.mxu0
        %703 = vmatpush.xpose.msra.mxu0 0.0
        %704 = vmatpush.xpose.msra.mxu0 0.0
        %705 = vmatpush.xpose.msra.mxu0 0.0
        %706 = vmatpush.xpose.msra.mxu0 0.0
        %707 = vmatpush.xpose.msra.mxu0 0.0
        %708 = vmatpush.xpose.msra.mxu0 0.0
        %709 = vmatpush.xpose.msra.mxu0 0.0
        %710 = vmatpush.xpose.msra.mxu0 0.0
        %711 = vmatpush.xpose.msra.mxu0 0.0
        %712 = vmatpush.xpose.msra.mxu0 0.0
        %713 = vmatpush.xpose.msra.mxu0 0.0
        %714 = vmatpush.xpose.msra.mxu0 0.0
        %715 = vmatpush.xpose.msra.mxu0 0.0
        %716 = vmatpush.xpose.msra.mxu0 0.0
        %717 = vmatpush.xpose.msra.mxu0 0.0
        %718 = vmatpush.xpose.msra.mxu0 %v681
        %719 = vmatmul.f32.gmra.mxu0 %v678
        %v720 = vpop.f32.mrf.mxu0
        %v721 = vadd.f32 %v701, %v720
        %722 = vdwg.mxu0
        %v723 = vadd.f32 %v671, %v721
        %s724 = scalar_lea.vmem %s3, 80
        %v725 = vld [vmem:[%s724] sm:$0x1f]
        %v726 = vld [vmem:[%s724 + $0x8] sm:$0x1f]
        %v727 = vrot.slane %v465, 5
        %v728 = vrot.slane %v466, 5
        %v730 = vsel %vm477, %v728, 0
        %v733 = vsel %vm477, %v726, 0
        %735 = vmatpush.xpose.msra.mxu0 0.0
        %736 = vmatpush.xpose.msra.mxu0 0.0
        %737 = vmatpush.xpose.msra.mxu0 0.0
        %738 = vmatpush.xpose.msra.mxu0 0.0
        %739 = vmatpush.xpose.msra.mxu0 0.0
        %740 = vmatpush.xpose.msra.mxu0 0.0
        %741 = vmatpush.xpose.msra.mxu0 0.0
        %742 = vmatpush.xpose.msra.mxu0 0.0
        %743 = vmatpush.xpose.msra.mxu0 0.0
        %744 = vmatpush.xpose.msra.mxu0 0.0
        %745 = vmatpush.xpose.msra.mxu0 0.0
        %746 = vmatpush.xpose.msra.mxu0 0.0
        %747 = vmatpush.xpose.msra.mxu0 0.0
        %748 = vmatpush.xpose.msra.mxu0 0.0
        %749 = vmatpush.xpose.msra.mxu0 0.0
        %750 = vmatpush.xpose.msra.mxu0 %v725
        %751 = vmatmul.f32.gmra.mxu0 %v727
        %v752 = vpop.f32.mrf.mxu0
        %v753 = vadd.f32 0.0, %v752
        %754 = vdwg.mxu0
        %755 = vmatpush.xpose.msra.mxu0 0.0
        %756 = vmatpush.xpose.msra.mxu0 0.0
        %757 = vmatpush.xpose.msra.mxu0 0.0
        %758 = vmatpush.xpose.msra.mxu0 0.0
        %759 = vmatpush.xpose.msra.mxu0 0.0
        %760 = vmatpush.xpose.msra.mxu0 0.0
        %761 = vmatpush.xpose.msra.mxu0 0.0
        %762 = vmatpush.xpose.msra.mxu0 0.0
        %763 = vmatpush.xpose.msra.mxu0 0.0
        %764 = vmatpush.xpose.msra.mxu0 0.0
        %765 = vmatpush.xpose.msra.mxu0 0.0
        %766 = vmatpush.xpose.msra.mxu0 0.0
        %767 = vmatpush.xpose.msra.mxu0 0.0
        %768 = vmatpush.xpose.msra.mxu0 0.0
        %769 = vmatpush.xpose.msra.mxu0 0.0
        %770 = vmatpush.xpose.msra.mxu0 %v733
        %771 = vmatmul.f32.gmra.mxu0 %v730
        %v772 = vpop.f32.mrf.mxu0
        %v773 = vadd.f32 %v753, %v772
        %774 = vdwg.mxu0
        %v775 = vadd.f32 %v723, %v773
        %s776 = scalar_lea.vmem %s3, 96
        %v777 = vld [vmem:[%s776] sm:$0x1f]
        %v778 = vld [vmem:[%s776 + $0x8] sm:$0x1f]
        %v779 = vrot.slane %v465, 6
        %v780 = vrot.slane %v466, 6
        %v782 = vsel %vm477, %v780, 0
        %v785 = vsel %vm477, %v778, 0
        %787 = vmatpush.xpose.msra.mxu0 0.0
        %788 = vmatpush.xpose.msra.mxu0 0.0
        %789 = vmatpush.xpose.msra.mxu0 0.0
        %790 = vmatpush.xpose.msra.mxu0 0.0
        %791 = vmatpush.xpose.msra.mxu0 0.0
        %792 = vmatpush.xpose.msra.mxu0 0.0
        %793 = vmatpush.xpose.msra.mxu0 0.0
        %794 = vmatpush.xpose.msra.mxu0 0.0
        %795 = vmatpush.xpose.msra.mxu0 0.0
        %796 = vmatpush.xpose.msra.mxu0 0.0
        %797 = vmatpush.xpose.msra.mxu0 0.0
        %798 = vmatpush.xpose.msra.mxu0 0.0
        %799 = vmatpush.xpose.msra.mxu0 0.0
        %800 = vmatpush.xpose.msra.mxu0 0.0
        %801 = vmatpush.xpose.msra.mxu0 0.0
        %802 = vmatpush.xpose.msra.mxu0 %v777
        %803 = vmatmul.f32.gmra.mxu0 %v779
        %v804 = vpop.f32.mrf.mxu0
        %v805 = vadd.f32 0.0, %v804
        %806 = vdwg.mxu0
        %807 = vmatpush.xpose.msra.mxu0 0.0
        %808 = vmatpush.xpose.msra.mxu0 0.0
        %809 = vmatpush.xpose.msra.mxu0 0.0
        %810 = vmatpush.xpose.msra.mxu0 0.0
        %811 = vmatpush.xpose.msra.mxu0 0.0
        %812 = vmatpush.xpose.msra.mxu0 0.0
        %813 = vmatpush.xpose.msra.mxu0 0.0
        %814 = vmatpush.xpose.msra.mxu0 0.0
        %815 = vmatpush.xpose.msra.mxu0 0.0
        %816 = vmatpush.xpose.msra.mxu0 0.0
        %817 = vmatpush.xpose.msra.mxu0 0.0
        %818 = vmatpush.xpose.msra.mxu0 0.0
        %819 = vmatpush.xpose.msra.mxu0 0.0
        %820 = vmatpush.xpose.msra.mxu0 0.0
        %821 = vmatpush.xpose.msra.mxu0 0.0
        %822 = vmatpush.xpose.msra.mxu0 %v785
        %823 = vmatmul.f32.gmra.mxu0 %v782
        %v824 = vpop.f32.mrf.mxu0
        %v825 = vadd.f32 %v805, %v824
        %826 = vdwg.mxu0
        %v827 = vadd.f32 %v775, %v825
        %s828 = scalar_lea.vmem %s3, 112
        %v829 = vld [vmem:[%s828] sm:$0x1f]
        %v830 = vld [vmem:[%s828 + $0x8] sm:$0x1f]
        %v831 = vrot.slane %v465, 7
        %v832 = vrot.slane %v466, 7
        %v834 = vsel %vm477, %v832, 0
        %v837 = vsel %vm477, %v830, 0
        %839 = vmatpush.xpose.msra.mxu0 0.0
        %840 = vmatpush.xpose.msra.mxu0 0.0
        %841 = vmatpush.xpose.msra.mxu0 0.0
        %842 = vmatpush.xpose.msra.mxu0 0.0
        %843 = vmatpush.xpose.msra.mxu0 0.0
        %844 = vmatpush.xpose.msra.mxu0 0.0
        %845 = vmatpush.xpose.msra.mxu0 0.0
        %846 = vmatpush.xpose.msra.mxu0 0.0
        %847 = vmatpush.xpose.msra.mxu0 0.0
        %848 = vmatpush.xpose.msra.mxu0 0.0
        %849 = vmatpush.xpose.msra.mxu0 0.0
        %850 = vmatpush.xpose.msra.mxu0 0.0
        %851 = vmatpush.xpose.msra.mxu0 0.0
        %852 = vmatpush.xpose.msra.mxu0 0.0
        %853 = vmatpush.xpose.msra.mxu0 0.0
        %854 = vmatpush.xpose.msra.mxu0 %v829
        %855 = vmatmul.f32.gmra.mxu0 %v831
        %v856 = vpop.f32.mrf.mxu0
        %v857 = vadd.f32 0.0, %v856
        %858 = vdwg.mxu0
        %859 = vmatpush.xpose.msra.mxu0 0.0
        %860 = vmatpush.xpose.msra.mxu0 0.0
        %861 = vmatpush.xpose.msra.mxu0 0.0
        %862 = vmatpush.xpose.msra.mxu0 0.0
        %863 = vmatpush.xpose.msra.mxu0 0.0
        %864 = vmatpush.xpose.msra.mxu0 0.0
        %865 = vmatpush.xpose.msra.mxu0 0.0
        %866 = vmatpush.xpose.msra.mxu0 0.0
        %867 = vmatpush.xpose.msra.mxu0 0.0
        %868 = vmatpush.xpose.msra.mxu0 0.0
        %869 = vmatpush.xpose.msra.mxu0 0.0
        %870 = vmatpush.xpose.msra.mxu0 0.0
        %871 = vmatpush.xpose.msra.mxu0 0.0
        %872 = vmatpush.xpose.msra.mxu0 0.0
        %873 = vmatpush.xpose.msra.mxu0 0.0
        %874 = vmatpush.xpose.msra.mxu0 %v837
        %875 = vmatmul.f32.gmra.mxu0 %v834
        %v876 = vpop.f32.mrf.mxu0
        %v877 = vadd.f32 %v857, %v876
        %878 = vdwg.mxu0
        %v879 = vadd.f32 %v827, %v877
        %v880 = vld [vmem:[%s4] sm:$0x1]
        %v881 = vadd.f32 %v879, %v880
        %vm882 = vcmask 32768
        %883 = vst.msk [vmem:[%s216] sm:$0x1] %vm882, %v881
        %s884 = sand.u32 %s137, 1
        %s885 = scalar_lea.sflag [#allocation3], %s884
        %s886 = sand.u32 %s137, 1
        %s887 = scalar_lea.vmem [#allocation2], %s886
        // Predicated region
        $region41: #{simple_cnn_forward.1} parent=39 // pred_check
          %p888 = pneg %p147
        $region42: #{simple_cnn_forward.1} parent=39 // pred_check_branch
          %890 = sbr.rel (%p888) target = $region44
        $region43: #{simple_cnn_forward.1} parent=39 // pred_region
          %892 = vsyncadd %s885, 0
          %s893 = scalar_lea.hbm %s5, %s19
          %s895 = sshll.u32 %s887, 4
          %s896 = int_to_ptr.vmem [resolvable:$true] %s895
          %s897 = sshll.u32 %s893, 4
          %s898 = int_to_ptr.hbm [resolvable:$true] %s897
          %900 = dma.vmem_to_hbm [thread:$0]  %s896, 16, %s898, %s885
        $region44: #{simple_cnn_forward.1} parent=39 // pred_fallthru
          _
      $region40: #{simple_cnn_forward.1} parent=5 // pred_fallthru
        _
      %p901 = scmp.le.s32.totalorder 2, %s14
      // Predicated region
      $region45: #{simple_cnn_forward.1} parent=5 // pred_check
        %p902 = pneg %p901
      $region46: #{simple_cnn_forward.1} parent=5 // pred_check_branch
        %904 = sbr.rel (%p902) target = $region48
      $region47: #{simple_cnn_forward.1} parent=5 // pred_region
        %s905 = ssub.s32 %s14, 2
        // Predicated region
        $region49: #{simple_cnn_forward.1} parent=47 // pred_check
          %p906 = pneg %p153
        $region50: #{simple_cnn_forward.1} parent=47 // pred_check_branch
          %908 = sbr.rel (%p906) target = $region52
        $region51: #{simple_cnn_forward.1} parent=47 // pred_region
          %s909 = sand.u32 %s138, 1
          %s910 = scalar_lea.sflag [#allocation3], %s909
          %s911 = sand.u32 %s138, 1
          %s912 = scalar_lea.vmem [#allocation2], %s911
          %914 = dma.done %s910, 16
        $region52: #{simple_cnn_forward.1} parent=47 // pred_fallthru
          _
      $region48: #{simple_cnn_forward.1} parent=5 // pred_fallthru
        _
    $region6: #{simple_cnn_forward.1} parent=1 // loop_footer
      %s18 = sadd.s32 1, %s14
    $region7: #{simple_cnn_forward.1} parent=1 // loop_footer_branch
      %13 = sbr.rel target = $region3
    $region8: #{simple_cnn_forward.1} parent=1 // loop_exit
      _
    %915 = vsyncpa [#allocation3], 1
    %s916 = scalar_lea.sflag [#allocation3], 1
    %917 = vsyncpa %s916, 1

</llo_original>
